<compile_context>
chip_gen: v7x
topology: tpu7x:2x2x1
jax: 0.10.0
libtpu: 0.0.40
codegen_flags: <defaults>
</compile_context>

<pallas_src>
import functools
import math

import jax
import jax.numpy as jnp
from jax.experimental import pallas as pl
from jax.experimental.pallas import tpu as pltpu

BN_EPS = 1e-5
N_VEC_ROWS = 16  # 5 layers x (bias, gamma, beta) + final bias


def decoder_kernel(x_ref, w1_ref, w_hid_ref, w5_ref, w6_ref, vecs_ref, o_ref,
                   *, hidden_dim, c_bar_dim, compute_dtype):
    B = x_ref.shape[0]
    inv_b = jnp.float32(1.0 / B)

    # Load the whole bias/gamma/beta slab once (4 vregs) and slice in-register.
    vecs = vecs_ref[...]                                  # [16, Fmax] f32

    def linear_bn_relu(h, w, row, feat):
        # rows [row, row+1, row+2] are (bias, gamma, beta)
        b = vecs[row:row + 1, :feat]
        g = vecs[row + 1:row + 2, :feat]
        bt = vecs[row + 2:row + 3, :feat]

        y = jnp.dot(h.astype(compute_dtype), w,
                    preferred_element_type=jnp.float32) + b

        # two independent cross-sublane reductions (back-to-back on the XLU)
        s1 = jnp.sum(y, axis=0, keepdims=True)            # [1, F]
        s2 = jnp.sum(y * y, axis=0, keepdims=True)        # [1, F]
        mu = s1 * inv_b
        var = jnp.maximum(s2 * inv_b - mu * mu, 0.0)       # clamped biased variance

        # fold BN + affine into one scale/shift on a single [1,F] row
        scale = g * jax.lax.rsqrt(var + BN_EPS)
        shift = bt - mu * scale
        return jnp.maximum(y * scale + shift, 0.0)

    h = x_ref[...].astype(jnp.float32)
    h = linear_bn_relu(h, w1_ref[...], 0, hidden_dim)
    h = linear_bn_relu(h, w_hid_ref[0], 3, hidden_dim)
    h = linear_bn_relu(h, w_hid_ref[1], 6, hidden_dim)
    h = linear_bn_relu(h, w_hid_ref[2], 9, hidden_dim)
    h = linear_bn_relu(h, w5_ref[...], 12, 256)

    out = (jnp.dot(h.astype(compute_dtype), w6_ref[...],
                   preferred_element_type=jnp.float32)
           + vecs[15:16, :c_bar_dim])
    o_ref[...] = out.astype(o_ref.dtype)


def _vmem_limit_bytes(x, params, c_bar_dim):
    """Working-set-derived scoped VMEM limit (weights resident + pipelined x/out)."""
    G, B, D = x.shape
    weight_bytes = sum(int(a.size) * a.dtype.itemsize for a in params)
    xio_bytes = 2 * (B * D * 4) + 2 * (B * c_bar_dim * 4)   # double-buffered x / out
    act_bytes = 6 * B * 256 * 4                              # live f32 activations
    need = 2 * weight_bytes + xio_bytes + act_bytes
    # keep a generous floor, stay far below v7x's 64 MiB physical VMEM
    return int(min(max(4 << 20, 2 * need), 32 << 20))


def decoder_forward(x, params, hidden_dim, c_bar_dim):
    """x: [G, B, z_dim+inp_dim] (or [B, z_dim+inp_dim]) f32.
    params: (w1, w_hid_stack[3,H,H], w5, w6, vecs[16,Fmax]).
    Each group g is an independent decoder invocation (BN stats per group)."""
    w1, w_hid, w5, w6, vecs = params
    squeeze = (x.ndim == 2)
    if squeeze:
        x = x[None]
    G, B, D = x.shape
    compute_dtype = w1.dtype  # f32 (exact) or bf16 (bandwidth / MXU-native path)

    def const_spec(arr):
        nd = arr.ndim
        return pl.BlockSpec(arr.shape, lambda g, _nd=nd: (0,) * _nd)

    kernel = functools.partial(decoder_kernel, hidden_dim=hidden_dim,
                               c_bar_dim=c_bar_dim, compute_dtype=compute_dtype)

    out = pl.pallas_call(
        kernel,
        out_shape=jax.ShapeDtypeStruct((G, B, c_bar_dim), jnp.float32),
        grid=(G,),
        in_specs=[
            pl.BlockSpec((None, B, D), lambda g: (g, 0, 0)),   # x: per-group block
            const_spec(w1),                                    # weights: resident
            const_spec(w_hid),
            const_spec(w5),
            const_spec(w6),
            const_spec(vecs),
        ],
        out_specs=pl.BlockSpec((None, B, c_bar_dim), lambda g: (g, 0, 0)),
        compiler_params=pltpu.CompilerParams(
            dimension_semantics=("parallel",),                 # v7x: shard groups on 2 TCs
            vmem_limit_bytes=_vmem_limit_bytes(x, params, c_bar_dim)),
    )(x, w1, w_hid, w5, w6, vecs)

    return out[0] if squeeze else out


def init_decoder_params(key, inp_dim, c_bar_dim, hidden_dim, z_dim,
                        weights_dtype=jnp.float32):
    """PyTorch-style init, packed:
       w1:[in0,H]  w_hid:[3,H,H]  w5:[H,256]  w6:[256,c_bar]  vecs:[16,Fmax]."""
    dims = [z_dim + inp_dim, hidden_dim, hidden_dim, hidden_dim, hidden_dim, 256,
            c_bar_dim]
    f_max = max(hidden_dim, 256, c_bar_dim)

    ws, bs = [], []
    for i in range(6):
        fan_in, fan_out = dims[i], dims[i + 1]
        key, kw, kb = jax.random.split(key, 3)
        bound = 1.0 / math.sqrt(fan_in)
        ws.append(jax.random.uniform(kw, (fan_in, fan_out), jnp.float32,
                                     -bound, bound))
        bs.append(jax.random.uniform(kb, (fan_out,), jnp.float32, -bound, bound))

    def pad_row(v):
        return jnp.zeros((f_max,), jnp.float32).at[:v.shape[0]].set(v)

    rows = []
    for i in range(5):
        fan_out = dims[i + 1]
        rows.append(pad_row(bs[i]))                                   # bias
        rows.append(pad_row(jnp.ones((fan_out,), jnp.float32)))       # gamma
        rows.append(pad_row(jnp.zeros((fan_out,), jnp.float32)))      # beta
    rows.append(pad_row(bs[5]))                                       # final bias
    vecs = jnp.stack(rows)                                            # [16, f_max] f32

    w_hid = jnp.stack([ws[1], ws[2], ws[3]])                          # [3, H, H]
    return (ws[0].astype(weights_dtype), w_hid.astype(weights_dtype),
            ws[4].astype(weights_dtype), ws[5].astype(weights_dtype), vecs)


def decoder_reference(x, params, hidden_dim, c_bar_dim):
    """Pure-JAX reference (two-pass BN, PyTorch training-mode semantics). x: [B, D]."""
    w1, w_hid, w5, w6, vecs = params
    ws = [w1, w_hid[0], w_hid[1], w_hid[2], w5]
    feats = [hidden_dim] * 4 + [256]
    h = x.astype(jnp.float32)
    for i in range(5):
        f = feats[i]
        b, g, bt = vecs[3 * i, :f], vecs[3 * i + 1, :f], vecs[3 * i + 2, :f]
        y = h @ ws[i].astype(jnp.float32) + b
        mu = jnp.mean(y, axis=0, keepdims=True)
        var = jnp.mean((y - mu) ** 2, axis=0, keepdims=True)
        h = jnp.maximum((y - mu) * jax.lax.rsqrt(var + BN_EPS) * g + bt, 0.0)
    return h @ w6.astype(jnp.float32) + vecs[15, :c_bar_dim]


if __name__ == "__main__":
    # Small shapes consistent with the module; G independent decoder batches are
    # fused into one pallas_call (one grid step per batch, BN stats per batch).
    inp_dim, c_bar_dim, hidden_dim, z_dim = 16, 8, 32, 16
    batch, groups = 8, 4

    key = jax.random.PRNGKey(0)
    key, kx = jax.random.split(key)
    x = jax.random.normal(kx, (groups, batch, z_dim + inp_dim), jnp.float32)

    # ---- f32 weight path (exact semantics) ----
    params = init_decoder_params(key, inp_dim, c_bar_dim, hidden_dim, z_dim)
    out = jax.block_until_ready(decoder_forward(x, params, hidden_dim, c_bar_dim))
    ref = jax.vmap(lambda xi: decoder_reference(xi, params, hidden_dim, c_bar_dim))(x)
    assert out.shape == (groups, batch, c_bar_dim)
    assert jnp.allclose(out, ref, atol=1e-3, rtol=1e-3), "f32 mismatch vs reference"

    # ---- bf16 weight path (bandwidth / native-MXU option; f32 accumulate + BN) ----
    w1, w_hid, w5, w6, vecs = params
    params_bf16 = (w1.astype(jnp.bfloat16), w_hid.astype(jnp.bfloat16),
                   w5.astype(jnp.bfloat16), w6.astype(jnp.bfloat16), vecs)
    out_bf16 = jax.block_until_ready(
        decoder_forward(x, params_bf16, hidden_dim, c_bar_dim))
    assert out_bf16.shape == (groups, batch, c_bar_dim)
    assert jnp.allclose(out_bf16, ref, atol=1e-1, rtol=1e-1), "bf16 path diverged"

    # 2-D input (single invocation) still works and matches.
    out_single = jax.block_until_ready(
        decoder_forward(x[0], params, hidden_dim, c_bar_dim))
    assert jnp.allclose(out_single, ref[0], atol=1e-3, rtol=1e-3)

    print("KERNEL_OK")
</pallas_src>

<mosaic_0001>
module attributes {stable_mosaic.version = 11 : i64} {
  func.func @decoder_kernel(%arg0: i32, %arg1: memref<1x8x32xf32, #tpu.memory_space<vmem>>, %arg2: memref<32x32xf32, #tpu.memory_space<vmem>>, %arg3: memref<3x32x32xf32, #tpu.memory_space<vmem>>, %arg4: memref<32x256xf32, #tpu.memory_space<vmem>>, %arg5: memref<256x8xf32, #tpu.memory_space<vmem>>, %arg6: memref<16x256xf32, #tpu.memory_space<vmem>>, %arg7: memref<1x8x8xf32, #tpu.memory_space<vmem>>) attributes {dimension_semantics = [#tpu.dimension_semantics<parallel>], iteration_bounds = array<i64: 4>, scalar_prefetch = 0 : i64, scratch_operands = 0 : i64, tpu.core_type = #tpu.core_type<tc>, window_params = [{transform_indices = @transform_0, window_bounds = array<i64: 1, 8, 32>}, {pipeline_mode = #tpu.pipeline_mode<synchronous>, transform_indices = @transform_1, window_bounds = array<i64: 32, 32>}, {pipeline_mode = #tpu.pipeline_mode<synchronous>, transform_indices = @transform_2, window_bounds = array<i64: 3, 32, 32>}, {pipeline_mode = #tpu.pipeline_mode<synchronous>, transform_indices = @transform_3, window_bounds = array<i64: 32, 256>}, {pipeline_mode = #tpu.pipeline_mode<synchronous>, transform_indices = @transform_4, window_bounds = array<i64: 256, 8>}, {pipeline_mode = #tpu.pipeline_mode<synchronous>, transform_indices = @transform_5, window_bounds = array<i64: 16, 256>}, {transform_indices = @transform_6, window_bounds = array<i64: 1, 8, 8>}]} {
    %c0 = arith.constant 0 : index
    %c0_0 = arith.constant 0 : index
    %0 = vector.load %arg6[%c0, %c0_0] : memref<16x256xf32, #tpu.memory_space<vmem>>, vector<16x256xf32>
    %c0_1 = arith.constant 0 : index
    %c0_2 = arith.constant 0 : index
    %c0_3 = arith.constant 0 : index
    %1 = vector.load %arg1[%c0_1, %c0_2, %c0_3] : memref<1x8x32xf32, #tpu.memory_space<vmem>>, vector<1x8x32xf32>
    %2 = vector.shape_cast %1 : vector<1x8x32xf32> to vector<8x32xf32>
    %c0_4 = arith.constant 0 : index
    %c0_5 = arith.constant 0 : index
    %3 = vector.load %arg2[%c0_4, %c0_5] : memref<32x32xf32, #tpu.memory_space<vmem>>, vector<32x32xf32>
    %4 = vector.extract_strided_slice %0 {offsets = [0, 0], sizes = [1, 32], strides = [1, 1]} : vector<16x256xf32> to vector<1x32xf32>
    %5 = vector.extract_strided_slice %0 {offsets = [1, 0], sizes = [1, 32], strides = [1, 1]} : vector<16x256xf32> to vector<1x32xf32>
    %6 = vector.extract_strided_slice %0 {offsets = [2, 0], sizes = [1, 32], strides = [1, 1]} : vector<16x256xf32> to vector<1x32xf32>
    %cst = arith.constant dense<0.000000e+00> : vector<8x32xf32>
    %7 = tpu.matmul %2, %3, %cst {dimension_numbers = #tpu.dot_dimension_numbers<[1], [0], [0], [1], [0, 0, 1, 1], [], []>} : vector<8x32xf32>, vector<32x32xf32>, vector<8x32xf32> -> vector<8x32xf32>
    %8 = vector.broadcast %4 : vector<1x32xf32> to vector<8x32xf32>
    %9 = arith.addf %7, %8 : vector<8x32xf32>
    %cst_6 = arith.constant dense<0.000000e+00> : vector<32xf32>
    %10 = vector.multi_reduction <add>, %9, %cst_6 [0] : vector<8x32xf32> to vector<32xf32>
    %11 = vector.shape_cast %10 : vector<32xf32> to vector<1x32xf32>
    %12 = arith.mulf %9, %9 : vector<8x32xf32>
    %cst_7 = arith.constant dense<0.000000e+00> : vector<32xf32>
    %13 = vector.multi_reduction <add>, %12, %cst_7 [0] : vector<8x32xf32> to vector<32xf32>
    %14 = vector.shape_cast %13 : vector<32xf32> to vector<1x32xf32>
    %cst_8 = arith.constant 1.250000e-01 : f32
    %15 = vector.broadcast %cst_8 : f32 to vector<1x32xf32>
    %16 = arith.mulf %11, %15 : vector<1x32xf32>
    %cst_9 = arith.constant 1.250000e-01 : f32
    %17 = vector.broadcast %cst_9 : f32 to vector<1x32xf32>
    %18 = arith.mulf %14, %17 : vector<1x32xf32>
    %19 = arith.mulf %16, %16 : vector<1x32xf32>
    %20 = arith.subf %18, %19 : vector<1x32xf32>
    %cst_10 = arith.constant 0.000000e+00 : f32
    %21 = vector.broadcast %cst_10 : f32 to vector<1x32xf32>
    %22 = arith.maximumf %20, %21 : vector<1x32xf32>
    %cst_11 = arith.constant 9.99999974E-6 : f32
    %23 = vector.broadcast %cst_11 : f32 to vector<1x32xf32>
    %24 = arith.addf %22, %23 : vector<1x32xf32>
    %25 = math.rsqrt %24 : vector<1x32xf32>
    %26 = arith.mulf %5, %25 : vector<1x32xf32>
    %27 = arith.mulf %16, %26 : vector<1x32xf32>
    %28 = arith.subf %6, %27 : vector<1x32xf32>
    %29 = vector.broadcast %26 : vector<1x32xf32> to vector<8x32xf32>
    %30 = arith.mulf %9, %29 : vector<8x32xf32>
    %31 = vector.broadcast %28 : vector<1x32xf32> to vector<8x32xf32>
    %32 = arith.addf %30, %31 : vector<8x32xf32>
    %cst_12 = arith.constant 0.000000e+00 : f32
    %33 = vector.broadcast %cst_12 : f32 to vector<8x32xf32>
    %34 = arith.maximumf %32, %33 : vector<8x32xf32>
    %c0_13 = arith.constant 0 : index
    %c0_14 = arith.constant 0 : index
    %c0_15 = arith.constant 0 : index
    %35 = vector.load %arg3[%c0_13, %c0_14, %c0_15] : memref<3x32x32xf32, #tpu.memory_space<vmem>>, vector<1x32x32xf32>
    %36 = vector.shape_cast %35 : vector<1x32x32xf32> to vector<32x32xf32>
    %37 = vector.extract_strided_slice %0 {offsets = [3, 0], sizes = [1, 32], strides = [1, 1]} : vector<16x256xf32> to vector<1x32xf32>
    %38 = vector.extract_strided_slice %0 {offsets = [4, 0], sizes = [1, 32], strides = [1, 1]} : vector<16x256xf32> to vector<1x32xf32>
    %39 = vector.extract_strided_slice %0 {offsets = [5, 0], sizes = [1, 32], strides = [1, 1]} : vector<16x256xf32> to vector<1x32xf32>
    %cst_16 = arith.constant dense<0.000000e+00> : vector<8x32xf32>
    %40 = tpu.matmul %34, %36, %cst_16 {dimension_numbers = #tpu.dot_dimension_numbers<[1], [0], [0], [1], [0, 0, 1, 1], [], []>} : vector<8x32xf32>, vector<32x32xf32>, vector<8x32xf32> -> vector<8x32xf32>
    %41 = vector.broadcast %37 : vector<1x32xf32> to vector<8x32xf32>
    %42 = arith.addf %40, %41 : vector<8x32xf32>
    %cst_17 = arith.constant dense<0.000000e+00> : vector<32xf32>
    %43 = vector.multi_reduction <add>, %42, %cst_17 [0] : vector<8x32xf32> to vector<32xf32>
    %44 = vector.shape_cast %43 : vector<32xf32> to vector<1x32xf32>
    %45 = arith.mulf %42, %42 : vector<8x32xf32>
    %cst_18 = arith.constant dense<0.000000e+00> : vector<32xf32>
    %46 = vector.multi_reduction <add>, %45, %cst_18 [0] : vector<8x32xf32> to vector<32xf32>
    %47 = vector.shape_cast %46 : vector<32xf32> to vector<1x32xf32>
    %cst_19 = arith.constant 1.250000e-01 : f32
    %48 = vector.broadcast %cst_19 : f32 to vector<1x32xf32>
    %49 = arith.mulf %44, %48 : vector<1x32xf32>
    %cst_20 = arith.constant 1.250000e-01 : f32
    %50 = vector.broadcast %cst_20 : f32 to vector<1x32xf32>
    %51 = arith.mulf %47, %50 : vector<1x32xf32>
    %52 = arith.mulf %49, %49 : vector<1x32xf32>
    %53 = arith.subf %51, %52 : vector<1x32xf32>
    %cst_21 = arith.constant 0.000000e+00 : f32
    %54 = vector.broadcast %cst_21 : f32 to vector<1x32xf32>
    %55 = arith.maximumf %53, %54 : vector<1x32xf32>
    %cst_22 = arith.constant 9.99999974E-6 : f32
    %56 = vector.broadcast %cst_22 : f32 to vector<1x32xf32>
    %57 = arith.addf %55, %56 : vector<1x32xf32>
    %58 = math.rsqrt %57 : vector<1x32xf32>
    %59 = arith.mulf %38, %58 : vector<1x32xf32>
    %60 = arith.mulf %49, %59 : vector<1x32xf32>
    %61 = arith.subf %39, %60 : vector<1x32xf32>
    %62 = vector.broadcast %59 : vector<1x32xf32> to vector<8x32xf32>
    %63 = arith.mulf %42, %62 : vector<8x32xf32>
    %64 = vector.broadcast %61 : vector<1x32xf32> to vector<8x32xf32>
    %65 = arith.addf %63, %64 : vector<8x32xf32>
    %cst_23 = arith.constant 0.000000e+00 : f32
    %66 = vector.broadcast %cst_23 : f32 to vector<8x32xf32>
    %67 = arith.maximumf %65, %66 : vector<8x32xf32>
    %c1 = arith.constant 1 : index
    %c0_24 = arith.constant 0 : index
    %c0_25 = arith.constant 0 : index
    %68 = vector.load %arg3[%c1, %c0_24, %c0_25] : memref<3x32x32xf32, #tpu.memory_space<vmem>>, vector<1x32x32xf32>
    %69 = vector.shape_cast %68 : vector<1x32x32xf32> to vector<32x32xf32>
    %70 = vector.extract_strided_slice %0 {offsets = [6, 0], sizes = [1, 32], strides = [1, 1]} : vector<16x256xf32> to vector<1x32xf32>
    %71 = vector.extract_strided_slice %0 {offsets = [7, 0], sizes = [1, 32], strides = [1, 1]} : vector<16x256xf32> to vector<1x32xf32>
    %72 = vector.extract_strided_slice %0 {offsets = [8, 0], sizes = [1, 32], strides = [1, 1]} : vector<16x256xf32> to vector<1x32xf32>
    %cst_26 = arith.constant dense<0.000000e+00> : vector<8x32xf32>
    %73 = tpu.matmul %67, %69, %cst_26 {dimension_numbers = #tpu.dot_dimension_numbers<[1], [0], [0], [1], [0, 0, 1, 1], [], []>} : vector<8x32xf32>, vector<32x32xf32>, vector<8x32xf32> -> vector<8x32xf32>
    %74 = vector.broadcast %70 : vector<1x32xf32> to vector<8x32xf32>
    %75 = arith.addf %73, %74 : vector<8x32xf32>
    %cst_27 = arith.constant dense<0.000000e+00> : vector<32xf32>
    %76 = vector.multi_reduction <add>, %75, %cst_27 [0] : vector<8x32xf32> to vector<32xf32>
    %77 = vector.shape_cast %76 : vector<32xf32> to vector<1x32xf32>
    %78 = arith.mulf %75, %75 : vector<8x32xf32>
    %cst_28 = arith.constant dense<0.000000e+00> : vector<32xf32>
    %79 = vector.multi_reduction <add>, %78, %cst_28 [0] : vector<8x32xf32> to vector<32xf32>
    %80 = vector.shape_cast %79 : vector<32xf32> to vector<1x32xf32>
    %cst_29 = arith.constant 1.250000e-01 : f32
    %81 = vector.broadcast %cst_29 : f32 to vector<1x32xf32>
    %82 = arith.mulf %77, %81 : vector<1x32xf32>
    %cst_30 = arith.constant 1.250000e-01 : f32
    %83 = vector.broadcast %cst_30 : f32 to vector<1x32xf32>
    %84 = arith.mulf %80, %83 : vector<1x32xf32>
    %85 = arith.mulf %82, %82 : vector<1x32xf32>
    %86 = arith.subf %84, %85 : vector<1x32xf32>
    %cst_31 = arith.constant 0.000000e+00 : f32
    %87 = vector.broadcast %cst_31 : f32 to vector<1x32xf32>
    %88 = arith.maximumf %86, %87 : vector<1x32xf32>
    %cst_32 = arith.constant 9.99999974E-6 : f32
    %89 = vector.broadcast %cst_32 : f32 to vector<1x32xf32>
    %90 = arith.addf %88, %89 : vector<1x32xf32>
    %91 = math.rsqrt %90 : vector<1x32xf32>
    %92 = arith.mulf %71, %91 : vector<1x32xf32>
    %93 = arith.mulf %82, %92 : vector<1x32xf32>
    %94 = arith.subf %72, %93 : vector<1x32xf32>
    %95 = vector.broadcast %92 : vector<1x32xf32> to vector<8x32xf32>
    %96 = arith.mulf %75, %95 : vector<8x32xf32>
    %97 = vector.broadcast %94 : vector<1x32xf32> to vector<8x32xf32>
    %98 = arith.addf %96, %97 : vector<8x32xf32>
    %cst_33 = arith.constant 0.000000e+00 : f32
    %99 = vector.broadcast %cst_33 : f32 to vector<8x32xf32>
    %100 = arith.maximumf %98, %99 : vector<8x32xf32>
    %c2 = arith.constant 2 : index
    %c0_34 = arith.constant 0 : index
    %c0_35 = arith.constant 0 : index
    %101 = vector.load %arg3[%c2, %c0_34, %c0_35] : memref<3x32x32xf32, #tpu.memory_space<vmem>>, vector<1x32x32xf32>
    %102 = vector.shape_cast %101 : vector<1x32x32xf32> to vector<32x32xf32>
    %103 = vector.extract_strided_slice %0 {offsets = [9, 0], sizes = [1, 32], strides = [1, 1]} : vector<16x256xf32> to vector<1x32xf32>
    %104 = vector.extract_strided_slice %0 {offsets = [10, 0], sizes = [1, 32], strides = [1, 1]} : vector<16x256xf32> to vector<1x32xf32>
    %105 = vector.extract_strided_slice %0 {offsets = [11, 0], sizes = [1, 32], strides = [1, 1]} : vector<16x256xf32> to vector<1x32xf32>
    %cst_36 = arith.constant dense<0.000000e+00> : vector<8x32xf32>
    %106 = tpu.matmul %100, %102, %cst_36 {dimension_numbers = #tpu.dot_dimension_numbers<[1], [0], [0], [1], [0, 0, 1, 1], [], []>} : vector<8x32xf32>, vector<32x32xf32>, vector<8x32xf32> -> vector<8x32xf32>
    %107 = vector.broadcast %103 : vector<1x32xf32> to vector<8x32xf32>
    %108 = arith.addf %106, %107 : vector<8x32xf32>
    %cst_37 = arith.constant dense<0.000000e+00> : vector<32xf32>
    %109 = vector.multi_reduction <add>, %108, %cst_37 [0] : vector<8x32xf32> to vector<32xf32>
    %110 = vector.shape_cast %109 : vector<32xf32> to vector<1x32xf32>
    %111 = arith.mulf %108, %108 : vector<8x32xf32>
    %cst_38 = arith.constant dense<0.000000e+00> : vector<32xf32>
    %112 = vector.multi_reduction <add>, %111, %cst_38 [0] : vector<8x32xf32> to vector<32xf32>
    %113 = vector.shape_cast %112 : vector<32xf32> to vector<1x32xf32>
    %cst_39 = arith.constant 1.250000e-01 : f32
    %114 = vector.broadcast %cst_39 : f32 to vector<1x32xf32>
    %115 = arith.mulf %110, %114 : vector<1x32xf32>
    %cst_40 = arith.constant 1.250000e-01 : f32
    %116 = vector.broadcast %cst_40 : f32 to vector<1x32xf32>
    %117 = arith.mulf %113, %116 : vector<1x32xf32>
    %118 = arith.mulf %115, %115 : vector<1x32xf32>
    %119 = arith.subf %117, %118 : vector<1x32xf32>
    %cst_41 = arith.constant 0.000000e+00 : f32
    %120 = vector.broadcast %cst_41 : f32 to vector<1x32xf32>
    %121 = arith.maximumf %119, %120 : vector<1x32xf32>
    %cst_42 = arith.constant 9.99999974E-6 : f32
    %122 = vector.broadcast %cst_42 : f32 to vector<1x32xf32>
    %123 = arith.addf %121, %122 : vector<1x32xf32>
    %124 = math.rsqrt %123 : vector<1x32xf32>
    %125 = arith.mulf %104, %124 : vector<1x32xf32>
    %126 = arith.mulf %115, %125 : vector<1x32xf32>
    %127 = arith.subf %105, %126 : vector<1x32xf32>
    %128 = vector.broadcast %125 : vector<1x32xf32> to vector<8x32xf32>
    %129 = arith.mulf %108, %128 : vector<8x32xf32>
    %130 = vector.broadcast %127 : vector<1x32xf32> to vector<8x32xf32>
    %131 = arith.addf %129, %130 : vector<8x32xf32>
    %cst_43 = arith.constant 0.000000e+00 : f32
    %132 = vector.broadcast %cst_43 : f32 to vector<8x32xf32>
    %133 = arith.maximumf %131, %132 : vector<8x32xf32>
    %c0_44 = arith.constant 0 : index
    %c0_45 = arith.constant 0 : index
    %134 = vector.load %arg4[%c0_44, %c0_45] : memref<32x256xf32, #tpu.memory_space<vmem>>, vector<32x256xf32>
    %135 = vector.extract_strided_slice %0 {offsets = [12, 0], sizes = [1, 256], strides = [1, 1]} : vector<16x256xf32> to vector<1x256xf32>
    %136 = vector.extract_strided_slice %0 {offsets = [13, 0], sizes = [1, 256], strides = [1, 1]} : vector<16x256xf32> to vector<1x256xf32>
    %137 = vector.extract_strided_slice %0 {offsets = [14, 0], sizes = [1, 256], strides = [1, 1]} : vector<16x256xf32> to vector<1x256xf32>
    %cst_46 = arith.constant dense<0.000000e+00> : vector<8x256xf32>
    %138 = tpu.matmul %133, %134, %cst_46 {dimension_numbers = #tpu.dot_dimension_numbers<[1], [0], [0], [1], [0, 0, 1, 1], [], []>} : vector<8x32xf32>, vector<32x256xf32>, vector<8x256xf32> -> vector<8x256xf32>
    %139 = vector.broadcast %135 : vector<1x256xf32> to vector<8x256xf32>
    %140 = arith.addf %138, %139 : vector<8x256xf32>
    %cst_47 = arith.constant dense<0.000000e+00> : vector<256xf32>
    %141 = vector.multi_reduction <add>, %140, %cst_47 [0] : vector<8x256xf32> to vector<256xf32>
    %142 = vector.shape_cast %141 : vector<256xf32> to vector<1x256xf32>
    %143 = arith.mulf %140, %140 : vector<8x256xf32>
    %cst_48 = arith.constant dense<0.000000e+00> : vector<256xf32>
    %144 = vector.multi_reduction <add>, %143, %cst_48 [0] : vector<8x256xf32> to vector<256xf32>
    %145 = vector.shape_cast %144 : vector<256xf32> to vector<1x256xf32>
    %cst_49 = arith.constant 1.250000e-01 : f32
    %146 = vector.broadcast %cst_49 : f32 to vector<1x256xf32>
    %147 = arith.mulf %142, %146 : vector<1x256xf32>
    %cst_50 = arith.constant 1.250000e-01 : f32
    %148 = vector.broadcast %cst_50 : f32 to vector<1x256xf32>
    %149 = arith.mulf %145, %148 : vector<1x256xf32>
    %150 = arith.mulf %147, %147 : vector<1x256xf32>
    %151 = arith.subf %149, %150 : vector<1x256xf32>
    %cst_51 = arith.constant 0.000000e+00 : f32
    %152 = vector.broadcast %cst_51 : f32 to vector<1x256xf32>
    %153 = arith.maximumf %151, %152 : vector<1x256xf32>
    %cst_52 = arith.constant 9.99999974E-6 : f32
    %154 = vector.broadcast %cst_52 : f32 to vector<1x256xf32>
    %155 = arith.addf %153, %154 : vector<1x256xf32>
    %156 = math.rsqrt %155 : vector<1x256xf32>
    %157 = arith.mulf %136, %156 : vector<1x256xf32>
    %158 = arith.mulf %147, %157 : vector<1x256xf32>
    %159 = arith.subf %137, %158 : vector<1x256xf32>
    %160 = vector.broadcast %157 : vector<1x256xf32> to vector<8x256xf32>
    %161 = arith.mulf %140, %160 : vector<8x256xf32>
    %162 = vector.broadcast %159 : vector<1x256xf32> to vector<8x256xf32>
    %163 = arith.addf %161, %162 : vector<8x256xf32>
    %cst_53 = arith.constant 0.000000e+00 : f32
    %164 = vector.broadcast %cst_53 : f32 to vector<8x256xf32>
    %165 = arith.maximumf %163, %164 : vector<8x256xf32>
    %c0_54 = arith.constant 0 : index
    %c0_55 = arith.constant 0 : index
    %166 = vector.load %arg5[%c0_54, %c0_55] : memref<256x8xf32, #tpu.memory_space<vmem>>, vector<256x8xf32>
    %cst_56 = arith.constant dense<0.000000e+00> : vector<8x8xf32>
    %167 = tpu.matmul %165, %166, %cst_56 {dimension_numbers = #tpu.dot_dimension_numbers<[1], [0], [0], [1], [0, 0, 1, 1], [], []>} : vector<8x256xf32>, vector<256x8xf32>, vector<8x8xf32> -> vector<8x8xf32>
    %168 = vector.extract_strided_slice %0 {offsets = [15, 0], sizes = [1, 8], strides = [1, 1]} : vector<16x256xf32> to vector<1x8xf32>
    %169 = vector.broadcast %168 : vector<1x8xf32> to vector<8x8xf32>
    %170 = arith.addf %167, %169 : vector<8x8xf32>
    %c0_57 = arith.constant 0 : index
    %c0_58 = arith.constant 0 : index
    %c0_59 = arith.constant 0 : index
    %171 = vector.load %arg7[%c0_57, %c0_58, %c0_59] : memref<1x8x8xf32, #tpu.memory_space<vmem>>, vector<1x8x8xf32>
    %172 = vector.shape_cast %171 : vector<1x8x8xf32> to vector<8x8xf32>
    %173 = vector.shape_cast %170 : vector<8x8xf32> to vector<1x8x8xf32>
    tpu.vector_store %arg7[%c0_57, %c0_58, %c0_59], %173 {strides = array<i32>} : memref<1x8x8xf32, #tpu.memory_space<vmem>>, vector<1x8x8xf32>,
    return
  }
  func.func @transform_0(%arg0: i32) -> (i32, i32, i32) {
    %c0_i32 = arith.constant 0 : i32
    %c0_i32_0 = arith.constant 0 : i32
    %c0_i32_1 = arith.constant 0 : i32
    return %arg0, %c0_i32, %c0_i32_0 : i32, i32, i32
  }
  func.func @transform_1(%arg0: i32) -> (i32, i32) {
    %c0_i32 = arith.constant 0 : i32
    %c0_i32_0 = arith.constant 0 : i32
    %c0_i32_1 = arith.constant 0 : i32
    return %c0_i32, %c0_i32_0 : i32, i32
  }
  func.func @transform_2(%arg0: i32) -> (i32, i32, i32) {
    %c0_i32 = arith.constant 0 : i32
    %c0_i32_0 = arith.constant 0 : i32
    %c0_i32_1 = arith.constant 0 : i32
    %c0_i32_2 = arith.constant 0 : i32
    return %c0_i32, %c0_i32_0, %c0_i32_1 : i32, i32, i32
  }
  func.func @transform_3(%arg0: i32) -> (i32, i32) {
    %c0_i32 = arith.constant 0 : i32
    %c0_i32_0 = arith.constant 0 : i32
    %c0_i32_1 = arith.constant 0 : i32
    return %c0_i32, %c0_i32_0 : i32, i32
  }
  func.func @transform_4(%arg0: i32) -> (i32, i32) {
    %c0_i32 = arith.constant 0 : i32
    %c0_i32_0 = arith.constant 0 : i32
    %c0_i32_1 = arith.constant 0 : i32
    return %c0_i32, %c0_i32_0 : i32, i32
  }
  func.func @transform_5(%arg0: i32) -> (i32, i32) {
    %c0_i32 = arith.constant 0 : i32
    %c0_i32_0 = arith.constant 0 : i32
    %c0_i32_1 = arith.constant 0 : i32
    return %c0_i32, %c0_i32_0 : i32, i32
  }
  func.func @transform_6(%arg0: i32) -> (i32, i32, i32) {
    %c0_i32 = arith.constant 0 : i32
    %c0_i32_0 = arith.constant 0 : i32
    %c0_i32_1 = arith.constant 0 : i32
    return %arg0, %c0_i32, %c0_i32_0 : i32, i32, i32
  }
}

</mosaic_0001>

<llo_original>
// kernel: tpu_custom_call.1
$region0: #{tpu_custom_call.1}
  #allocation0 [shape = 'u32[]', space=smem, size = 0x4, offset = 0x4, fixed_abs, tag = 'smem constant byte address 0x4 - core index']
  #allocation1 [shape = 'u32[144,128]{1,0:T(1,128)}', space=vmem, size = 0x12000, scoped, tag = 'internal scratch']
  %s0 = inlined_call_operand.vmem [shape: f32[4,8,32], index: 0, kind: input, shape index: {}]
  %s1 = inlined_call_operand.vmem [shape: f32[32,32], index: 1, kind: input, shape index: {}]
  %s2 = inlined_call_operand.vmem [shape: f32[3,32,32], index: 2, kind: input, shape index: {}]
  %s3 = inlined_call_operand.vmem [shape: f32[32,256], index: 3, kind: input, shape index: {}]
  %s4 = inlined_call_operand.vmem [shape: f32[256,8], index: 4, kind: input, shape index: {}]
  %s5 = inlined_call_operand.vmem [shape: f32[16,256], index: 5, kind: input, shape index: {}]
  %s6 = inlined_call_operand.hbm [shape: f32[4,8,8], index: 6, kind: output, shape index: {}]
  %s7 = sld [smem:[#allocation0]]
  $region57: #{tpu_custom_call.1} parent=0
    _
  %s9 = ssub.s32 1, %s7
  %s10 = scalar_select 0, %s9, %s7
  $region1: #{tpu_custom_call.1} parent=0
    #allocation2 [shape = 'u8[8192]{0}', space=vmem, size = 0x2000, scoped, tag = 'output window, operand 0']
    #allocation3 [shape = 's32[2]{0}', space=sflag, size = 0x8, scoped, tag = 'scoped memory for tpu_custom_call.1']
    %11 = vsyncpa [#allocation3], 0
    %s12 = scalar_lea.sflag [#allocation3], 1
    %13 = vsyncpa %s12, 0
    loop: start=0, step=1, limit=6
    $region2: #{tpu_custom_call.1} parent=1 // loop_pre_header
      _
    $region3: #{tpu_custom_call.1} parent=1 // loop_header
      %s15 = sphi 0, %s19
      %p16 = scmp.ge.s32.totalorder %s15, 6
      %s25 = sphi 0, %s27
      %s28 = sphi 0, %s25
      %s29 = sphi 0, %s28
      %s45 = sphi 0, %s29
      %s49 = sphi 0, %s49
      %s51 = sphi 0, %s49
      %s52 = sphi 0, %s51
      %s66 = sphi 0, %s52
      %s70 = sphi 0, %s70
      %s72 = sphi 0, %s70
      %s73 = sphi 0, %s72
      %s87 = sphi 0, %s73
      %s91 = sphi 0, %s91
      %s93 = sphi 0, %s91
      %s94 = sphi 0, %s93
      %s108 = sphi 0, %s94
      %s112 = sphi 0, %s112
      %s114 = sphi 0, %s112
      %s115 = sphi 0, %s114
      %s129 = sphi 0, %s115
      %s133 = sphi 0, %s133
      %s135 = sphi 0, %s133
      %s136 = sphi 0, %s135
      %s150 = sphi 0, %s136
      %s156 = sphi 0, %s158
      %s159 = sphi 0, %s156
      %s160 = sphi 0, %s159
      %s176 = sphi 0, %s160
    $region4: #{tpu_custom_call.1} parent=1 // loop_header_branch
      %18 = sbr.rel (%p16) target = $region8
    $region5: #{tpu_custom_call.1} parent=1 // loop_body
      %s20 = ssub.s32 %s15, 1
      %s21 = ssub.s32 %s15, 2
      %s22 = sadd.s32 %s15, 1
      %s23 = ssub.s32 %s15, %s22
      %p24 = scmp.eq.s32.totalorder %s23, 0
      %s26 = sadd.s32 %s25, 1
      %s27 = scalar_select %p24, %s25, %s26
      %p30 = pneg %p24
      %p31 = scmp.eq.s32.totalorder %s15, 3
      %p32 = por %p30, %p31
      %p33 = scmp.ne.s32.totalorder %s25, %s28
      %p34 = scmp.eq.s32.totalorder %s15, 0
      %p35 = por %p33, %p34
      %p36 = scmp.ne.s32.totalorder %s25, %s28
      %p37 = scmp.eq.s32.totalorder %s20, 3
      %p38 = por %p36, %p37
      %p39 = scmp.ne.s32.totalorder %s28, %s29
      %p40 = scmp.eq.s32.totalorder %s20, 0
      %p41 = por %p39, %p40
      %p42 = scmp.ne.s32.totalorder %s28, %s29
      %p43 = scmp.eq.s32.totalorder %s21, 3
      %p44 = por %p42, %p43
      %p46 = scmp.ne.s32.totalorder %s29, %s45
      %p47 = scmp.eq.s32.totalorder %s21, 0
      %p48 = por %p46, %p47
      %s50 = sadd.s32 %s49, 1
      %p53 = scmp.eq.s32.totalorder %s15, 3
      %p54 = scmp.ne.s32.totalorder %s49, %s51
      %p55 = scmp.eq.s32.totalorder %s15, 0
      %p56 = por %p54, %p55
      %p57 = scmp.ne.s32.totalorder %s49, %s51
      %p58 = scmp.eq.s32.totalorder %s20, 3
      %p59 = por %p57, %p58
      %p60 = scmp.ne.s32.totalorder %s51, %s52
      %p61 = scmp.eq.s32.totalorder %s20, 0
      %p62 = por %p60, %p61
      %p63 = scmp.ne.s32.totalorder %s51, %s52
      %p64 = scmp.eq.s32.totalorder %s21, 3
      %p65 = por %p63, %p64
      %p67 = scmp.ne.s32.totalorder %s52, %s66
      %p68 = scmp.eq.s32.totalorder %s21, 0
      %p69 = por %p67, %p68
      %s71 = sadd.s32 %s70, 1
      %p74 = scmp.eq.s32.totalorder %s15, 3
      %p75 = scmp.ne.s32.totalorder %s70, %s72
      %p76 = scmp.eq.s32.totalorder %s15, 0
      %p77 = por %p75, %p76
      %p78 = scmp.ne.s32.totalorder %s70, %s72
      %p79 = scmp.eq.s32.totalorder %s20, 3
      %p80 = por %p78, %p79
      %p81 = scmp.ne.s32.totalorder %s72, %s73
      %p82 = scmp.eq.s32.totalorder %s20, 0
      %p83 = por %p81, %p82
      %p84 = scmp.ne.s32.totalorder %s72, %s73
      %p85 = scmp.eq.s32.totalorder %s21, 3
      %p86 = por %p84, %p85
      %p88 = scmp.ne.s32.totalorder %s73, %s87
      %p89 = scmp.eq.s32.totalorder %s21, 0
      %p90 = por %p88, %p89
      %s92 = sadd.s32 %s91, 1
      %p95 = scmp.eq.s32.totalorder %s15, 3
      %p96 = scmp.ne.s32.totalorder %s91, %s93
      %p97 = scmp.eq.s32.totalorder %s15, 0
      %p98 = por %p96, %p97
      %p99 = scmp.ne.s32.totalorder %s91, %s93
      %p100 = scmp.eq.s32.totalorder %s20, 3
      %p101 = por %p99, %p100
      %p102 = scmp.ne.s32.totalorder %s93, %s94
      %p103 = scmp.eq.s32.totalorder %s20, 0
      %p104 = por %p102, %p103
      %p105 = scmp.ne.s32.totalorder %s93, %s94
      %p106 = scmp.eq.s32.totalorder %s21, 3
      %p107 = por %p105, %p106
      %p109 = scmp.ne.s32.totalorder %s94, %s108
      %p110 = scmp.eq.s32.totalorder %s21, 0
      %p111 = por %p109, %p110
      %s113 = sadd.s32 %s112, 1
      %p116 = scmp.eq.s32.totalorder %s15, 3
      %p117 = scmp.ne.s32.totalorder %s112, %s114
      %p118 = scmp.eq.s32.totalorder %s15, 0
      %p119 = por %p117, %p118
      %p120 = scmp.ne.s32.totalorder %s112, %s114
      %p121 = scmp.eq.s32.totalorder %s20, 3
      %p122 = por %p120, %p121
      %p123 = scmp.ne.s32.totalorder %s114, %s115
      %p124 = scmp.eq.s32.totalorder %s20, 0
      %p125 = por %p123, %p124
      %p126 = scmp.ne.s32.totalorder %s114, %s115
      %p127 = scmp.eq.s32.totalorder %s21, 3
      %p128 = por %p126, %p127
      %p130 = scmp.ne.s32.totalorder %s115, %s129
      %p131 = scmp.eq.s32.totalorder %s21, 0
      %p132 = por %p130, %p131
      %s134 = sadd.s32 %s133, 1
      %p137 = scmp.eq.s32.totalorder %s15, 3
      %p138 = scmp.ne.s32.totalorder %s133, %s135
      %p139 = scmp.eq.s32.totalorder %s15, 0
      %p140 = por %p138, %p139
      %p141 = scmp.ne.s32.totalorder %s133, %s135
      %p142 = scmp.eq.s32.totalorder %s20, 3
      %p143 = por %p141, %p142
      %p144 = scmp.ne.s32.totalorder %s135, %s136
      %p145 = scmp.eq.s32.totalorder %s20, 0
      %p146 = por %p144, %p145
      %p147 = scmp.ne.s32.totalorder %s135, %s136
      %p148 = scmp.eq.s32.totalorder %s21, 3
      %p149 = por %p147, %p148
      %p151 = scmp.ne.s32.totalorder %s136, %s150
      %p152 = scmp.eq.s32.totalorder %s21, 0
      %p153 = por %p151, %p152
      %s154 = ssub.s32 %s15, %s22
      %p155 = scmp.eq.s32.totalorder %s154, 0
      %s157 = sadd.s32 %s156, 1
      %s158 = scalar_select %p155, %s156, %s157
      %p161 = pneg %p155
      %p162 = scmp.eq.s32.totalorder %s15, 3
      %p163 = por %p161, %p162
      %p164 = scmp.ne.s32.totalorder %s156, %s159
      %p165 = scmp.eq.s32.totalorder %s15, 0
      %p166 = por %p164, %p165
      %p167 = scmp.ne.s32.totalorder %s156, %s159
      %p168 = scmp.eq.s32.totalorder %s20, 3
      %p169 = por %p167, %p168
      %p170 = scmp.ne.s32.totalorder %s159, %s160
      %p171 = scmp.eq.s32.totalorder %s20, 0
      %p172 = por %p170, %p171
      %p173 = scmp.ne.s32.totalorder %s159, %s160
      %p174 = scmp.eq.s32.totalorder %s21, 3
      %p175 = por %p173, %p174
      %p177 = scmp.ne.s32.totalorder %s160, %s176
      %p178 = scmp.eq.s32.totalorder %s21, 0
      %p179 = por %p177, %p178
      %p180 = scmp.le.s32.totalorder 1, %s15
      %p181 = scmp.lt.s32.totalorder %s15, 5
      %p182 = pnand %p180, %p181
      %p183 = pneg %p182
      // Predicated region
      $region9: #{tpu_custom_call.1} parent=5 // pred_check
        _
      $region10: #{tpu_custom_call.1} parent=5 // pred_check_branch
        %185 = sbr.rel (%p182) target = $region12
      $region11: #{tpu_custom_call.1} parent=5 // pred_region
        %s186 = ssub.s32 %s15, 1
        // Predicated region
        $region13: #{tpu_custom_call.1} parent=11 // pred_check
          %p187 = pneg %p62
        $region14: #{tpu_custom_call.1} parent=11 // pred_check_branch
          %189 = sbr.rel (%p187) target = $region16
        $region15: #{tpu_custom_call.1} parent=11 // pred_region
          _
        $region16: #{tpu_custom_call.1} parent=11 // pred_fallthru
          _
        // Predicated region
        $region17: #{tpu_custom_call.1} parent=11 // pred_check
          %p190 = pneg %p83
        $region18: #{tpu_custom_call.1} parent=11 // pred_check_branch
          %192 = sbr.rel (%p190) target = $region20
        $region19: #{tpu_custom_call.1} parent=11 // pred_region
          _
        $region20: #{tpu_custom_call.1} parent=11 // pred_fallthru
          _
        // Predicated region
        $region21: #{tpu_custom_call.1} parent=11 // pred_check
          %p193 = pneg %p104
        $region22: #{tpu_custom_call.1} parent=11 // pred_check_branch
          %195 = sbr.rel (%p193) target = $region24
        $region23: #{tpu_custom_call.1} parent=11 // pred_region
          _
        $region24: #{tpu_custom_call.1} parent=11 // pred_fallthru
          _
        // Predicated region
        $region25: #{tpu_custom_call.1} parent=11 // pred_check
          %p196 = pneg %p125
        $region26: #{tpu_custom_call.1} parent=11 // pred_check_branch
          %198 = sbr.rel (%p196) target = $region28
        $region27: #{tpu_custom_call.1} parent=11 // pred_region
          _
        $region28: #{tpu_custom_call.1} parent=11 // pred_fallthru
          _
        // Predicated region
        $region29: #{tpu_custom_call.1} parent=11 // pred_check
          %p199 = pneg %p146
        $region30: #{tpu_custom_call.1} parent=11 // pred_check_branch
          %201 = sbr.rel (%p199) target = $region32
        $region31: #{tpu_custom_call.1} parent=11 // pred_region
          _
        $region32: #{tpu_custom_call.1} parent=11 // pred_fallthru
          _
      $region12: #{tpu_custom_call.1} parent=5 // pred_fallthru
        _
      %p202 = scmp.lt.s32.totalorder %s15, 4
      // Predicated region
      $region33: #{tpu_custom_call.1} parent=5 // pred_check
        %p203 = pneg %p202
      $region34: #{tpu_custom_call.1} parent=5 // pred_check_branch
        %205 = sbr.rel (%p203) target = $region36
      $region35: #{tpu_custom_call.1} parent=5 // pred_region
        // Predicated region
        $region37: #{tpu_custom_call.1} parent=35 // pred_check
          %p206 = pneg %p35
        $region38: #{tpu_custom_call.1} parent=35 // pred_check_branch
          %208 = sbr.rel (%p206) target = $region40
        $region39: #{tpu_custom_call.1} parent=35 // pred_region
          %p209 = scmp.lt.s32.totalorder %s15, 3
          %s210 = scalar_select %p209, %s15, 3
          %s211 = smul.addr %s210, 8
          %s212 = scalar_lea.vmem %s0, %s211
        $region40: #{tpu_custom_call.1} parent=35 // pred_fallthru
          _
      $region36: #{tpu_custom_call.1} parent=5 // pred_fallthru
        _
      %p213 = scmp.le.s32.totalorder 1, %s15
      %p214 = scmp.lt.s32.totalorder %s15, 5
      %p215 = pnand %p213, %p214
      %p216 = pneg %p215
      // Predicated region
      $region41: #{tpu_custom_call.1} parent=5 // pred_check
        _
      $region42: #{tpu_custom_call.1} parent=5 // pred_check_branch
        %218 = sbr.rel (%p215) target = $region44
      $region43: #{tpu_custom_call.1} parent=5 // pred_region
        %s219 = ssub.s32 %s15, 1
        %p220 = scmp.lt.s32.totalorder %s20, 3
        %s221 = scalar_select %p220, %s20, 3
        %s222 = smul.addr %s221, 8
        %s223 = scalar_lea.vmem %s0, %s222
        %p224 = pneg %p41
        %p225 = pneg %p38
        %p226 = pneg %p62
        %p227 = pneg %p59
        %p228 = pneg %p83
        %p229 = pneg %p80
        %p230 = pneg %p104
        %p231 = pneg %p101
        %p232 = pneg %p125
        %p233 = pneg %p122
        %p234 = pneg %p146
        %p235 = pneg %p143
        %p236 = pneg %p172
        %p237 = pneg %p169
        %s238 = sand.u32 %s159, 1
        %s239 = scalar_lea.sflag [#allocation3], %s238
        %s240 = sand.u32 %s159, 1
        %s241 = smul.addr %s240, 8
        %s242 = scalar_lea.vmem [#allocation2], %s241
        %p243 = scmp.lt.s32.totalorder %s20, 3
        %s244 = scalar_select %p243, %s20, 3
        %s245 = smul.addr %s244, 8
        %s246 = scalar_lea.vmem %s0, %s245
        %v247 = vld [vmem:[%s5] sm:$0xff]
        %v248 = vld [vmem:[%s5 + $0x10] sm:$0xff]
        %v249 = vld [vmem:[%s5 + $0x18] sm:$0xff]
        %v250 = vld [vmem:[%s246] sm:$0xff]
        %v251 = vld [vmem:[%s1] sm:$0xff]
        %v252 = vld [vmem:[%s1 + $0x8] sm:$0xff]
        %v253 = vld [vmem:[%s1 + $0x10] sm:$0xff]
        %v254 = vld [vmem:[%s1 + $0x18] sm:$0xff]
        %v255 = vlaneseq
        %v256 = vshrl.u32 %v255, 7
        %v257 = vsub.s32 0, %v256
        %v258 = vrot.slane %v247, %v257
        %vm259 = vcmask 261120
        %v261 = vsel %vm259, %v250, 0
        %263 = vmatprep.subr.mxu0 0.0
        %264 = vmatpush1.msra.mxu0 %v251
        %265 = vmatprep.subr.mxu0 0.0
        %266 = vmatpush1.msra.mxu0 %v252
        %267 = vmatprep.subr.mxu0 0.0
        %268 = vmatpush1.msra.mxu0 %v253
        %269 = vmatprep.subr.mxu0 0.0
        %270 = vmatpush1.msra.mxu0 %v254
        %271 = vmatprep.subr.mxu0 0.0
        %272 = vmatpush1.msra.mxu0 0.0
        %273 = vmatprep.subr.mxu0 0.0
        %274 = vmatpush1.msra.mxu0 0.0
        %275 = vmatprep.subr.mxu0 0.0
        %276 = vmatpush1.msra.mxu0 0.0
        %277 = vmatprep.subr.mxu0 0.0
        %278 = vmatpush1.msra.mxu0 0.0
        %279 = vmatprep.subr.mxu0 0.0
        %280 = vmatpush1.msra.mxu0 0.0
        %281 = vmatprep.subr.mxu0 0.0
        %282 = vmatpush1.msra.mxu0 0.0
        %283 = vmatprep.subr.mxu0 0.0
        %284 = vmatpush1.msra.mxu0 0.0
        %285 = vmatprep.subr.mxu0 0.0
        %286 = vmatpush1.msra.mxu0 0.0
        %287 = vmatprep.subr.mxu0 0.0
        %288 = vmatpush1.msra.mxu0 0.0
        %289 = vmatprep.subr.mxu0 0.0
        %290 = vmatpush1.msra.mxu0 0.0
        %291 = vmatprep.subr.mxu0 0.0
        %292 = vmatpush1.msra.mxu0 0.0
        %293 = vmatprep.subr.mxu0 0.0
        %294 = vmatpush1.msra.mxu0 0.0
        %295 = vmatprep.subr.mxu0 0.0
        %296 = vmatpush1.msra.mxu0 0.0
        %297 = vmatprep.subr.mxu0 0.0
        %298 = vmatpush1.msra.mxu0 0.0
        %299 = vmatprep.subr.mxu0 0.0
        %300 = vmatpush1.msra.mxu0 0.0
        %301 = vmatprep.subr.mxu0 0.0
        %302 = vmatpush1.msra.mxu0 0.0
        %303 = vmatprep.subr.mxu0 0.0
        %304 = vmatpush1.msra.mxu0 0.0
        %305 = vmatprep.subr.mxu0 0.0
        %306 = vmatpush1.msra.mxu0 0.0
        %307 = vmatprep.subr.mxu0 0.0
        %308 = vmatpush1.msra.mxu0 0.0
        %309 = vmatprep.subr.mxu0 0.0
        %310 = vmatpush1.msra.mxu0 0.0
        %311 = vmatprep.subr.mxu0 0.0
        %312 = vmatpush1.msra.mxu0 0.0
        %313 = vmatprep.subr.mxu0 0.0
        %314 = vmatpush1.msra.mxu0 0.0
        %315 = vmatprep.subr.mxu0 0.0
        %316 = vmatpush1.msra.mxu0 0.0
        %317 = vmatprep.subr.mxu0 0.0
        %318 = vmatpush1.msra.mxu0 0.0
        %319 = vmatprep.subr.mxu0 0.0
        %320 = vmatpush1.msra.mxu0 0.0
        %321 = vmatprep.subr.mxu0 0.0
        %322 = vmatpush1.msra.mxu0 0.0
        %323 = vmatprep.subr.mxu0 0.0
        %324 = vmatpush1.msra.mxu0 0.0
        %325 = vmatprep.subr.mxu0 0.0
        %326 = vmatpush1.msra.mxu0 0.0
        %327 = vmatprep.mubr.f32.mxu0 0.0
        %328 = vmatmul.mubr.f32.gmra.mrb[0].mxu0 %v261
        %v329 = vpop.f32.mrb[0].mxu0
        %v330 = vadd.f32 %v258, %v329
        %v331 = vpop.f32.mrb[0].mxu0
        %332 = vdwg.mxu0
        %v333 = vsel %vm259, %v330, 0.0
        %v334 = vrot.slane %v333, 4
        %v335 = vadd.f32 %v333, %v334
        %v336 = vrot.slane %v335, 2
        %v337 = vadd.f32 %v335, %v336
        %v338 = vrot.slane %v337, 1
        %v339 = vadd.f32 %v337, %v338
        %v340 = vmul.f32 %v330, %v330
        %v341 = vsel %vm259, %v340, 0.0
        %v342 = vrot.slane %v341, 4
        %v343 = vadd.f32 %v341, %v342
        %v344 = vrot.slane %v343, 2
        %v345 = vadd.f32 %v343, %v344
        %v346 = vrot.slane %v345, 1
        %v347 = vadd.f32 %v345, %v346
        %v348 = vmul.f32 %v339, 0.125
        %v349 = vmul.f32 %v347, 0.125
        %v350 = vmul.f32 %v348, %v348
        %v351 = vsub.f32 %v349, %v350
        %v352 = vmax.f32 %v351, 0.0
        %v353 = vadd.f32 %v352, 1e-05
        %v354 = vrsqrt.pop %v353
        %v355 = vmul.f32 %v247, %v354
        %v356 = vmul.f32 %v348, %v355
        %v358 = vrot.slane %v356, 7
        %v360 = vsub.f32 %v247, %v358
        %v361 = vlaneseq
        %v362 = vshrl.u32 %v361, 7
        %v363 = vsub.s32 1, %v362
        %v364 = vrot.slane %v355, %v363
        %v365 = vmul.f32 %v330, %v364
        %v366 = vlaneseq
        %v367 = vshrl.u32 %v366, 7
        %v368 = vsub.s32 2, %v367
        %v369 = vrot.slane %v360, %v368
        %v370 = vadd.f32 %v365, %v369
        %v371 = vmax.f32 %v370, 0.0
        %v372 = vld [vmem:[%s2] sm:$0xff]
        %v373 = vld [vmem:[%s2 + $0x8] sm:$0xff]
        %v374 = vld [vmem:[%s2 + $0x10] sm:$0xff]
        %v375 = vld [vmem:[%s2 + $0x18] sm:$0xff]
        %v376 = vlaneseq
        %v377 = vshrl.u32 %v376, 7
        %v378 = vsub.s32 3, %v377
        %v379 = vrot.slane %v247, %v378
        %v381 = vsel %vm259, %v371, 0
        %383 = vmatprep.subr.mxu0 0.0
        %384 = vmatpush1.msra.mxu0 %v372
        %385 = vmatprep.subr.mxu0 0.0
        %386 = vmatpush1.msra.mxu0 %v373
        %387 = vmatprep.subr.mxu0 0.0
        %388 = vmatpush1.msra.mxu0 %v374
        %389 = vmatprep.subr.mxu0 0.0
        %390 = vmatpush1.msra.mxu0 %v375
        %391 = vmatprep.subr.mxu0 0.0
        %392 = vmatpush1.msra.mxu0 0.0
        %393 = vmatprep.subr.mxu0 0.0
        %394 = vmatpush1.msra.mxu0 0.0
        %395 = vmatprep.subr.mxu0 0.0
        %396 = vmatpush1.msra.mxu0 0.0
        %397 = vmatprep.subr.mxu0 0.0
        %398 = vmatpush1.msra.mxu0 0.0
        %399 = vmatprep.subr.mxu0 0.0
        %400 = vmatpush1.msra.mxu0 0.0
        %401 = vmatprep.subr.mxu0 0.0
        %402 = vmatpush1.msra.mxu0 0.0
        %403 = vmatprep.subr.mxu0 0.0
        %404 = vmatpush1.msra.mxu0 0.0
        %405 = vmatprep.subr.mxu0 0.0
        %406 = vmatpush1.msra.mxu0 0.0
        %407 = vmatprep.subr.mxu0 0.0
        %408 = vmatpush1.msra.mxu0 0.0
        %409 = vmatprep.subr.mxu0 0.0
        %410 = vmatpush1.msra.mxu0 0.0
        %411 = vmatprep.subr.mxu0 0.0
        %412 = vmatpush1.msra.mxu0 0.0
        %413 = vmatprep.subr.mxu0 0.0
        %414 = vmatpush1.msra.mxu0 0.0
        %415 = vmatprep.subr.mxu0 0.0
        %416 = vmatpush1.msra.mxu0 0.0
        %417 = vmatprep.subr.mxu0 0.0
        %418 = vmatpush1.msra.mxu0 0.0
        %419 = vmatprep.subr.mxu0 0.0
        %420 = vmatpush1.msra.mxu0 0.0
        %421 = vmatprep.subr.mxu0 0.0
        %422 = vmatpush1.msra.mxu0 0.0
        %423 = vmatprep.subr.mxu0 0.0
        %424 = vmatpush1.msra.mxu0 0.0
        %425 = vmatprep.subr.mxu0 0.0
        %426 = vmatpush1.msra.mxu0 0.0
        %427 = vmatprep.subr.mxu0 0.0
        %428 = vmatpush1.msra.mxu0 0.0
        %429 = vmatprep.subr.mxu0 0.0
        %430 = vmatpush1.msra.mxu0 0.0
        %431 = vmatprep.subr.mxu0 0.0
        %432 = vmatpush1.msra.mxu0 0.0
        %433 = vmatprep.subr.mxu0 0.0
        %434 = vmatpush1.msra.mxu0 0.0
        %435 = vmatprep.subr.mxu0 0.0
        %436 = vmatpush1.msra.mxu0 0.0
        %437 = vmatprep.subr.mxu0 0.0
        %438 = vmatpush1.msra.mxu0 0.0
        %439 = vmatprep.subr.mxu0 0.0
        %440 = vmatpush1.msra.mxu0 0.0
        %441 = vmatprep.subr.mxu0 0.0
        %442 = vmatpush1.msra.mxu0 0.0
        %443 = vmatprep.subr.mxu0 0.0
        %444 = vmatpush1.msra.mxu0 0.0
        %445 = vmatprep.subr.mxu0 0.0
        %446 = vmatpush1.msra.mxu0 0.0
        %447 = vmatprep.mubr.f32.mxu0 0.0
        %448 = vmatmul.mubr.f32.gmra.mrb[0].mxu0 %v381
        %v449 = vpop.f32.mrb[0].mxu0
        %v450 = vadd.f32 %v379, %v449
        %v451 = vpop.f32.mrb[0].mxu0
        %452 = vdwg.mxu0
        %v453 = vsel %vm259, %v450, 0.0
        %v454 = vrot.slane %v453, 4
        %v455 = vadd.f32 %v453, %v454
        %v456 = vrot.slane %v455, 2
        %v457 = vadd.f32 %v455, %v456
        %v458 = vrot.slane %v457, 1
        %v459 = vadd.f32 %v457, %v458
        %v460 = vmul.f32 %v450, %v450
        %v461 = vsel %vm259, %v460, 0.0
        %v462 = vrot.slane %v461, 4
        %v463 = vadd.f32 %v461, %v462
        %v464 = vrot.slane %v463, 2
        %v465 = vadd.f32 %v463, %v464
        %v466 = vrot.slane %v465, 1
        %v467 = vadd.f32 %v465, %v466
        %v468 = vmul.f32 %v459, 0.125
        %v469 = vmul.f32 %v467, 0.125
        %v470 = vmul.f32 %v468, %v468
        %v471 = vsub.f32 %v469, %v470
        %v472 = vmax.f32 %v471, 0.0
        %v473 = vadd.f32 %v472, 1e-05
        %v474 = vrsqrt.pop %v473
        %v475 = vmul.f32 %v247, %v474
        %v476 = vmul.f32 %v468, %v475
        %v478 = vrot.slane %v476, 7
        %v480 = vsub.f32 %v247, %v478
        %v481 = vlaneseq
        %v482 = vshrl.u32 %v481, 7
        %v483 = vsub.s32 4, %v482
        %v484 = vrot.slane %v475, %v483
        %v485 = vmul.f32 %v450, %v484
        %v486 = vlaneseq
        %v487 = vshrl.u32 %v486, 7
        %v488 = vsub.s32 5, %v487
        %v489 = vrot.slane %v480, %v488
        %v490 = vadd.f32 %v485, %v489
        %v491 = vmax.f32 %v490, 0.0
        %s492 = scalar_lea.vmem %s2, 32
        %v493 = vld [vmem:[%s492] sm:$0xff]
        %v494 = vld [vmem:[%s492 + $0x8] sm:$0xff]
        %v495 = vld [vmem:[%s492 + $0x10] sm:$0xff]
        %v496 = vld [vmem:[%s492 + $0x18] sm:$0xff]
        %v497 = vlaneseq
        %v498 = vshrl.u32 %v497, 7
        %v499 = vsub.s32 6, %v498
        %v500 = vrot.slane %v247, %v499
        %v502 = vsel %vm259, %v491, 0
        %504 = vmatprep.subr.mxu0 0.0
        %505 = vmatpush1.msra.mxu0 %v493
        %506 = vmatprep.subr.mxu0 0.0
        %507 = vmatpush1.msra.mxu0 %v494
        %508 = vmatprep.subr.mxu0 0.0
        %509 = vmatpush1.msra.mxu0 %v495
        %510 = vmatprep.subr.mxu0 0.0
        %511 = vmatpush1.msra.mxu0 %v496
        %512 = vmatprep.subr.mxu0 0.0
        %513 = vmatpush1.msra.mxu0 0.0
        %514 = vmatprep.subr.mxu0 0.0
        %515 = vmatpush1.msra.mxu0 0.0
        %516 = vmatprep.subr.mxu0 0.0
        %517 = vmatpush1.msra.mxu0 0.0
        %518 = vmatprep.subr.mxu0 0.0
        %519 = vmatpush1.msra.mxu0 0.0
        %520 = vmatprep.subr.mxu0 0.0
        %521 = vmatpush1.msra.mxu0 0.0
        %522 = vmatprep.subr.mxu0 0.0
        %523 = vmatpush1.msra.mxu0 0.0
        %524 = vmatprep.subr.mxu0 0.0
        %525 = vmatpush1.msra.mxu0 0.0
        %526 = vmatprep.subr.mxu0 0.0
        %527 = vmatpush1.msra.mxu0 0.0
        %528 = vmatprep.subr.mxu0 0.0
        %529 = vmatpush1.msra.mxu0 0.0
        %530 = vmatprep.subr.mxu0 0.0
        %531 = vmatpush1.msra.mxu0 0.0
        %532 = vmatprep.subr.mxu0 0.0
        %533 = vmatpush1.msra.mxu0 0.0
        %534 = vmatprep.subr.mxu0 0.0
        %535 = vmatpush1.msra.mxu0 0.0
        %536 = vmatprep.subr.mxu0 0.0
        %537 = vmatpush1.msra.mxu0 0.0
        %538 = vmatprep.subr.mxu0 0.0
        %539 = vmatpush1.msra.mxu0 0.0
        %540 = vmatprep.subr.mxu0 0.0
        %541 = vmatpush1.msra.mxu0 0.0
        %542 = vmatprep.subr.mxu0 0.0
        %543 = vmatpush1.msra.mxu0 0.0
        %544 = vmatprep.subr.mxu0 0.0
        %545 = vmatpush1.msra.mxu0 0.0
        %546 = vmatprep.subr.mxu0 0.0
        %547 = vmatpush1.msra.mxu0 0.0
        %548 = vmatprep.subr.mxu0 0.0
        %549 = vmatpush1.msra.mxu0 0.0
        %550 = vmatprep.subr.mxu0 0.0
        %551 = vmatpush1.msra.mxu0 0.0
        %552 = vmatprep.subr.mxu0 0.0
        %553 = vmatpush1.msra.mxu0 0.0
        %554 = vmatprep.subr.mxu0 0.0
        %555 = vmatpush1.msra.mxu0 0.0
        %556 = vmatprep.subr.mxu0 0.0
        %557 = vmatpush1.msra.mxu0 0.0
        %558 = vmatprep.subr.mxu0 0.0
        %559 = vmatpush1.msra.mxu0 0.0
        %560 = vmatprep.subr.mxu0 0.0
        %561 = vmatpush1.msra.mxu0 0.0
        %562 = vmatprep.subr.mxu0 0.0
        %563 = vmatpush1.msra.mxu0 0.0
        %564 = vmatprep.subr.mxu0 0.0
        %565 = vmatpush1.msra.mxu0 0.0
        %566 = vmatprep.subr.mxu0 0.0
        %567 = vmatpush1.msra.mxu0 0.0
        %568 = vmatprep.mubr.f32.mxu0 0.0
        %569 = vmatmul.mubr.f32.gmra.mrb[0].mxu0 %v502
        %v570 = vpop.f32.mrb[0].mxu0
        %v571 = vadd.f32 %v500, %v570
        %v572 = vpop.f32.mrb[0].mxu0
        %573 = vdwg.mxu0
        %v574 = vsel %vm259, %v571, 0.0
        %v575 = vrot.slane %v574, 4
        %v576 = vadd.f32 %v574, %v575
        %v577 = vrot.slane %v576, 2
        %v578 = vadd.f32 %v576, %v577
        %v579 = vrot.slane %v578, 1
        %v580 = vadd.f32 %v578, %v579
        %v581 = vmul.f32 %v571, %v571
        %v582 = vsel %vm259, %v581, 0.0
        %v583 = vrot.slane %v582, 4
        %v584 = vadd.f32 %v582, %v583
        %v585 = vrot.slane %v584, 2
        %v586 = vadd.f32 %v584, %v585
        %v587 = vrot.slane %v586, 1
        %v588 = vadd.f32 %v586, %v587
        %v589 = vmul.f32 %v580, 0.125
        %v590 = vmul.f32 %v588, 0.125
        %v591 = vmul.f32 %v589, %v589
        %v592 = vsub.f32 %v590, %v591
        %v593 = vmax.f32 %v592, 0.0
        %v594 = vadd.f32 %v593, 1e-05
        %v595 = vrsqrt.pop %v594
        %v596 = vmul.f32 %v247, %v595
        %v597 = vmul.f32 %v589, %v596
        %v599 = vrot.slane %v597, 7
        %v601 = vsub.f32 %v248, %v599
        %v602 = vlaneseq
        %v603 = vshrl.u32 %v602, 7
        %v604 = vsub.s32 7, %v603
        %v605 = vrot.slane %v596, %v604
        %v606 = vmul.f32 %v571, %v605
        %v607 = vlaneseq
        %v608 = vshrl.u32 %v607, 7
        %v609 = vsub.s32 0, %v608
        %v610 = vrot.slane %v601, %v609
        %v611 = vadd.f32 %v606, %v610
        %v612 = vmax.f32 %v611, 0.0
        %s613 = scalar_lea.vmem %s2, 64
        %v614 = vld [vmem:[%s613] sm:$0xff]
        %v615 = vld [vmem:[%s613 + $0x8] sm:$0xff]
        %v616 = vld [vmem:[%s613 + $0x10] sm:$0xff]
        %v617 = vld [vmem:[%s613 + $0x18] sm:$0xff]
        %v618 = vlaneseq
        %v619 = vshrl.u32 %v618, 7
        %v620 = vsub.s32 1, %v619
        %v621 = vrot.slane %v248, %v620
        %v623 = vsel %vm259, %v612, 0
        %625 = vmatprep.subr.mxu0 0.0
        %626 = vmatpush1.msra.mxu0 %v614
        %627 = vmatprep.subr.mxu0 0.0
        %628 = vmatpush1.msra.mxu0 %v615
        %629 = vmatprep.subr.mxu0 0.0
        %630 = vmatpush1.msra.mxu0 %v616
        %631 = vmatprep.subr.mxu0 0.0
        %632 = vmatpush1.msra.mxu0 %v617
        %633 = vmatprep.subr.mxu0 0.0
        %634 = vmatpush1.msra.mxu0 0.0
        %635 = vmatprep.subr.mxu0 0.0
        %636 = vmatpush1.msra.mxu0 0.0
        %637 = vmatprep.subr.mxu0 0.0
        %638 = vmatpush1.msra.mxu0 0.0
        %639 = vmatprep.subr.mxu0 0.0
        %640 = vmatpush1.msra.mxu0 0.0
        %641 = vmatprep.subr.mxu0 0.0
        %642 = vmatpush1.msra.mxu0 0.0
        %643 = vmatprep.subr.mxu0 0.0
        %644 = vmatpush1.msra.mxu0 0.0
        %645 = vmatprep.subr.mxu0 0.0
        %646 = vmatpush1.msra.mxu0 0.0
        %647 = vmatprep.subr.mxu0 0.0
        %648 = vmatpush1.msra.mxu0 0.0
        %649 = vmatprep.subr.mxu0 0.0
        %650 = vmatpush1.msra.mxu0 0.0
        %651 = vmatprep.subr.mxu0 0.0
        %652 = vmatpush1.msra.mxu0 0.0
        %653 = vmatprep.subr.mxu0 0.0
        %654 = vmatpush1.msra.mxu0 0.0
        %655 = vmatprep.subr.mxu0 0.0
        %656 = vmatpush1.msra.mxu0 0.0
        %657 = vmatprep.subr.mxu0 0.0
        %658 = vmatpush1.msra.mxu0 0.0
        %659 = vmatprep.subr.mxu0 0.0
        %660 = vmatpush1.msra.mxu0 0.0
        %661 = vmatprep.subr.mxu0 0.0
        %662 = vmatpush1.msra.mxu0 0.0
        %663 = vmatprep.subr.mxu0 0.0
        %664 = vmatpush1.msra.mxu0 0.0
        %665 = vmatprep.subr.mxu0 0.0
        %666 = vmatpush1.msra.mxu0 0.0
        %667 = vmatprep.subr.mxu0 0.0
        %668 = vmatpush1.msra.mxu0 0.0
        %669 = vmatprep.subr.mxu0 0.0
        %670 = vmatpush1.msra.mxu0 0.0
        %671 = vmatprep.subr.mxu0 0.0
        %672 = vmatpush1.msra.mxu0 0.0
        %673 = vmatprep.subr.mxu0 0.0
        %674 = vmatpush1.msra.mxu0 0.0
        %675 = vmatprep.subr.mxu0 0.0
        %676 = vmatpush1.msra.mxu0 0.0
        %677 = vmatprep.subr.mxu0 0.0
        %678 = vmatpush1.msra.mxu0 0.0
        %679 = vmatprep.subr.mxu0 0.0
        %680 = vmatpush1.msra.mxu0 0.0
        %681 = vmatprep.subr.mxu0 0.0
        %682 = vmatpush1.msra.mxu0 0.0
        %683 = vmatprep.subr.mxu0 0.0
        %684 = vmatpush1.msra.mxu0 0.0
        %685 = vmatprep.subr.mxu0 0.0
        %686 = vmatpush1.msra.mxu0 0.0
        %687 = vmatprep.subr.mxu0 0.0
        %688 = vmatpush1.msra.mxu0 0.0
        %689 = vmatprep.mubr.f32.mxu0 0.0
        %690 = vmatmul.mubr.f32.gmra.mrb[0].mxu0 %v623
        %v691 = vpop.f32.mrb[0].mxu0
        %v692 = vadd.f32 %v621, %v691
        %v693 = vpop.f32.mrb[0].mxu0
        %694 = vdwg.mxu0
        %v695 = vsel %vm259, %v692, 0.0
        %v696 = vrot.slane %v695, 4
        %v697 = vadd.f32 %v695, %v696
        %v698 = vrot.slane %v697, 2
        %v699 = vadd.f32 %v697, %v698
        %v700 = vrot.slane %v699, 1
        %v701 = vadd.f32 %v699, %v700
        %v702 = vmul.f32 %v692, %v692
        %v703 = vsel %vm259, %v702, 0.0
        %v704 = vrot.slane %v703, 4
        %v705 = vadd.f32 %v703, %v704
        %v706 = vrot.slane %v705, 2
        %v707 = vadd.f32 %v705, %v706
        %v708 = vrot.slane %v707, 1
        %v709 = vadd.f32 %v707, %v708
        %v710 = vmul.f32 %v701, 0.125
        %v711 = vmul.f32 %v709, 0.125
        %v712 = vmul.f32 %v710, %v710
        %v713 = vsub.f32 %v711, %v712
        %v714 = vmax.f32 %v713, 0.0
        %v715 = vadd.f32 %v714, 1e-05
        %v716 = vrsqrt.pop %v715
        %v717 = vmul.f32 %v248, %v716
        %v718 = vmul.f32 %v710, %v717
        %v720 = vrot.slane %v718, 7
        %v722 = vsub.f32 %v248, %v720
        %v723 = vlaneseq
        %v724 = vshrl.u32 %v723, 7
        %v725 = vsub.s32 2, %v724
        %v726 = vrot.slane %v717, %v725
        %v727 = vmul.f32 %v692, %v726
        %v728 = vlaneseq
        %v729 = vshrl.u32 %v728, 7
        %v730 = vsub.s32 3, %v729
        %v731 = vrot.slane %v722, %v730
        %v732 = vadd.f32 %v727, %v731
        %v733 = vmax.f32 %v732, 0.0
        %v734 = vld [vmem:[%s3] sm:$0xff]
        %v735 = vld [vmem:[%s3 + $0x8] sm:$0xff]
        %v736 = vld [vmem:[%s3 + $0x10] sm:$0xff]
        %v737 = vld [vmem:[%s3 + $0x18] sm:$0xff]
        %v738 = vld [vmem:[%s3 + $0x20] sm:$0xff]
        %v739 = vld [vmem:[%s3 + $0x28] sm:$0xff]
        %v740 = vld [vmem:[%s3 + $0x30] sm:$0xff]
        %v741 = vld [vmem:[%s3 + $0x38] sm:$0xff]
        %v742 = vlaneseq
        %v743 = vshrl.u32 %v742, 7
        %v744 = vsub.s32 4, %v743
        %v745 = vrot.slane %v248, %v744
        %v746 = vlaneseq
        %v747 = vshrl.u32 %v746, 7
        %v748 = vsub.s32 4, %v747
        %v749 = vrot.slane %v249, %v748
        %v751 = vsel %vm259, %v733, 0
        %753 = vmatprep.subr.mxu0 %v735
        %754 = vmatpush1.msra.mxu0 %v734
        %755 = vmatprep.subr.mxu0 %v737
        %756 = vmatpush1.msra.mxu0 %v736
        %757 = vmatprep.subr.mxu0 %v739
        %758 = vmatpush1.msra.mxu0 %v738
        %759 = vmatprep.subr.mxu0 %v741
        %760 = vmatpush1.msra.mxu0 %v740
        %761 = vmatprep.subr.mxu0 0.0
        %762 = vmatpush1.msra.mxu0 0.0
        %763 = vmatprep.subr.mxu0 0.0
        %764 = vmatpush1.msra.mxu0 0.0
        %765 = vmatprep.subr.mxu0 0.0
        %766 = vmatpush1.msra.mxu0 0.0
        %767 = vmatprep.subr.mxu0 0.0
        %768 = vmatpush1.msra.mxu0 0.0
        %769 = vmatprep.subr.mxu0 0.0
        %770 = vmatpush1.msra.mxu0 0.0
        %771 = vmatprep.subr.mxu0 0.0
        %772 = vmatpush1.msra.mxu0 0.0
        %773 = vmatprep.subr.mxu0 0.0
        %774 = vmatpush1.msra.mxu0 0.0
        %775 = vmatprep.subr.mxu0 0.0
        %776 = vmatpush1.msra.mxu0 0.0
        %777 = vmatprep.subr.mxu0 0.0
        %778 = vmatpush1.msra.mxu0 0.0
        %779 = vmatprep.subr.mxu0 0.0
        %780 = vmatpush1.msra.mxu0 0.0
        %781 = vmatprep.subr.mxu0 0.0
        %782 = vmatpush1.msra.mxu0 0.0
        %783 = vmatprep.subr.mxu0 0.0
        %784 = vmatpush1.msra.mxu0 0.0
        %785 = vmatprep.subr.mxu0 0.0
        %786 = vmatpush1.msra.mxu0 0.0
        %787 = vmatprep.subr.mxu0 0.0
        %788 = vmatpush1.msra.mxu0 0.0
        %789 = vmatprep.subr.mxu0 0.0
        %790 = vmatpush1.msra.mxu0 0.0
        %791 = vmatprep.subr.mxu0 0.0
        %792 = vmatpush1.msra.mxu0 0.0
        %793 = vmatprep.subr.mxu0 0.0
        %794 = vmatpush1.msra.mxu0 0.0
        %795 = vmatprep.subr.mxu0 0.0
        %796 = vmatpush1.msra.mxu0 0.0
        %797 = vmatprep.subr.mxu0 0.0
        %798 = vmatpush1.msra.mxu0 0.0
        %799 = vmatprep.subr.mxu0 0.0
        %800 = vmatpush1.msra.mxu0 0.0
        %801 = vmatprep.subr.mxu0 0.0
        %802 = vmatpush1.msra.mxu0 0.0
        %803 = vmatprep.subr.mxu0 0.0
        %804 = vmatpush1.msra.mxu0 0.0
        %805 = vmatprep.subr.mxu0 0.0
        %806 = vmatpush1.msra.mxu0 0.0
        %807 = vmatprep.subr.mxu0 0.0
        %808 = vmatpush1.msra.mxu0 0.0
        %809 = vmatprep.subr.mxu0 0.0
        %810 = vmatpush1.msra.mxu0 0.0
        %811 = vmatprep.subr.mxu0 0.0
        %812 = vmatpush1.msra.mxu0 0.0
        %813 = vmatprep.subr.mxu0 0.0
        %814 = vmatpush1.msra.mxu0 0.0
        %815 = vmatprep.subr.mxu0 0.0
        %816 = vmatpush1.msra.mxu0 0.0
        %817 = vmatprep.mubr.f32.mxu0 0.0
        %818 = vmatmul.mubr.f32.gmra.mrb[0].mxu0 %v751
        %v819 = vpop.f32.mrb[0].mxu0
        %v820 = vadd.f32 %v745, %v819
        %v821 = vpop.f32.mrb[0].mxu0
        %v822 = vadd.f32 %v749, %v821
        %823 = vdwg.mxu0
        %v824 = vrot.slane %v820, 4
        %v825 = vadd.f32 %v820, %v824
        %v826 = vrot.slane %v825, 2
        %v827 = vadd.f32 %v825, %v826
        %v828 = vrot.slane %v827, 1
        %v829 = vadd.f32 %v827, %v828
        %v830 = vrot.slane %v822, 4
        %v831 = vadd.f32 %v822, %v830
        %v832 = vrot.slane %v831, 2
        %v833 = vadd.f32 %v831, %v832
        %v834 = vrot.slane %v833, 1
        %v835 = vadd.f32 %v833, %v834
        %v836 = vmul.f32 %v820, %v820
        %v837 = vmul.f32 %v822, %v822
        %v838 = vrot.slane %v836, 4
        %v839 = vadd.f32 %v836, %v838
        %v840 = vrot.slane %v839, 2
        %v841 = vadd.f32 %v839, %v840
        %v842 = vrot.slane %v841, 1
        %v843 = vadd.f32 %v841, %v842
        %v844 = vrot.slane %v837, 4
        %v845 = vadd.f32 %v837, %v844
        %v846 = vrot.slane %v845, 2
        %v847 = vadd.f32 %v845, %v846
        %v848 = vrot.slane %v847, 1
        %v849 = vadd.f32 %v847, %v848
        %v850 = vmul.f32 %v829, 0.125
        %v851 = vmul.f32 %v835, 0.125
        %v852 = vmul.f32 %v843, 0.125
        %v853 = vmul.f32 %v849, 0.125
        %v854 = vmul.f32 %v850, %v850
        %v855 = vmul.f32 %v851, %v851
        %v856 = vsub.f32 %v852, %v854
        %v857 = vsub.f32 %v853, %v855
        %v858 = vmax.f32 %v856, 0.0
        %v859 = vmax.f32 %v857, 0.0
        %v860 = vadd.f32 %v858, 1e-05
        %v861 = vadd.f32 %v859, 1e-05
        %v862 = vrsqrt.pop %v860
        %v863 = vrsqrt.pop %v861
        %v864 = vmul.f32 %v248, %v862
        %v865 = vmul.f32 %v249, %v863
        %v866 = vmul.f32 %v850, %v864
        %v867 = vmul.f32 %v851, %v865
        %v870 = vrot.slane %v866, 7
        %v871 = vrot.slane %v867, 7
        %v874 = vsub.f32 %v248, %v870
        %v875 = vsub.f32 %v249, %v871
        %v876 = vlaneseq
        %v877 = vshrl.u32 %v876, 7
        %v878 = vsub.s32 5, %v877
        %v879 = vrot.slane %v864, %v878
        %v880 = vlaneseq
        %v881 = vshrl.u32 %v880, 7
        %v882 = vsub.s32 5, %v881
        %v883 = vrot.slane %v865, %v882
        %v884 = vmul.f32 %v820, %v879
        %v885 = vmul.f32 %v822, %v883
        %v886 = vlaneseq
        %v887 = vshrl.u32 %v886, 7
        %v888 = vsub.s32 6, %v887
        %v889 = vrot.slane %v874, %v888
        %v890 = vlaneseq
        %v891 = vshrl.u32 %v890, 7
        %v892 = vsub.s32 6, %v891
        %v893 = vrot.slane %v875, %v892
        %v894 = vadd.f32 %v884, %v889
        %v895 = vadd.f32 %v885, %v893
        %v896 = vmax.f32 %v894, 0.0
        %v897 = vmax.f32 %v895, 0.0
        %v898 = vld [vmem:[%s4] sm:$0xff]
        %v899 = vld [vmem:[%s4 + $0x8] sm:$0xff]
        %v900 = vld [vmem:[%s4 + $0x10] sm:$0xff]
        %v901 = vld [vmem:[%s4 + $0x18] sm:$0xff]
        %v902 = vld [vmem:[%s4 + $0x20] sm:$0xff]
        %v903 = vld [vmem:[%s4 + $0x28] sm:$0xff]
        %v904 = vld [vmem:[%s4 + $0x30] sm:$0xff]
        %v905 = vld [vmem:[%s4 + $0x38] sm:$0xff]
        %v906 = vld [vmem:[%s4 + $0x40] sm:$0xff]
        %v907 = vld [vmem:[%s4 + $0x48] sm:$0xff]
        %v908 = vld [vmem:[%s4 + $0x50] sm:$0xff]
        %v909 = vld [vmem:[%s4 + $0x58] sm:$0xff]
        %v910 = vld [vmem:[%s4 + $0x60] sm:$0xff]
        %v911 = vld [vmem:[%s4 + $0x68] sm:$0xff]
        %v912 = vld [vmem:[%s4 + $0x70] sm:$0xff]
        %v913 = vld [vmem:[%s4 + $0x78] sm:$0xff]
        %v914 = vld [vmem:[%s4 + $0x80] sm:$0xff]
        %v915 = vld [vmem:[%s4 + $0x88] sm:$0xff]
        %v916 = vld [vmem:[%s4 + $0x90] sm:$0xff]
        %v917 = vld [vmem:[%s4 + $0x98] sm:$0xff]
        %v918 = vld [vmem:[%s4 + $0xa0] sm:$0xff]
        %v919 = vld [vmem:[%s4 + $0xa8] sm:$0xff]
        %v920 = vld [vmem:[%s4 + $0xb0] sm:$0xff]
        %v921 = vld [vmem:[%s4 + $0xb8] sm:$0xff]
        %v922 = vld [vmem:[%s4 + $0xc0] sm:$0xff]
        %v923 = vld [vmem:[%s4 + $0xc8] sm:$0xff]
        %v924 = vld [vmem:[%s4 + $0xd0] sm:$0xff]
        %v925 = vld [vmem:[%s4 + $0xd8] sm:$0xff]
        %v926 = vld [vmem:[%s4 + $0xe0] sm:$0xff]
        %v927 = vld [vmem:[%s4 + $0xe8] sm:$0xff]
        %v928 = vld [vmem:[%s4 + $0xf0] sm:$0xff]
        %v929 = vld [vmem:[%s4 + $0xf8] sm:$0xff]
        %v930 = vlaneseq
        %v931 = vshrl.u32 %v930, 7
        %v932 = vsub.s32 7, %v931
        %v933 = vrot.slane %v248, %v932
        %934 = vmatprep.subr.mxu0 0.0
        %935 = vmatpush1.msra.mxu0 %v898
        %936 = vmatprep.subr.mxu0 0.0
        %937 = vmatpush1.msra.mxu0 %v899
        %938 = vmatprep.subr.mxu0 0.0
        %939 = vmatpush1.msra.mxu0 %v900
        %940 = vmatprep.subr.mxu0 0.0
        %941 = vmatpush1.msra.mxu0 %v901
        %942 = vmatprep.subr.mxu0 0.0
        %943 = vmatpush1.msra.mxu0 %v902
        %944 = vmatprep.subr.mxu0 0.0
        %945 = vmatpush1.msra.mxu0 %v903
        %946 = vmatprep.subr.mxu0 0.0
        %947 = vmatpush1.msra.mxu0 %v904
        %948 = vmatprep.subr.mxu0 0.0
        %949 = vmatpush1.msra.mxu0 %v905
        %950 = vmatprep.subr.mxu0 0.0
        %951 = vmatpush1.msra.mxu0 %v906
        %952 = vmatprep.subr.mxu0 0.0
        %953 = vmatpush1.msra.mxu0 %v907
        %954 = vmatprep.subr.mxu0 0.0
        %955 = vmatpush1.msra.mxu0 %v908
        %956 = vmatprep.subr.mxu0 0.0
        %957 = vmatpush1.msra.mxu0 %v909
        %958 = vmatprep.subr.mxu0 0.0
        %959 = vmatpush1.msra.mxu0 %v910
        %960 = vmatprep.subr.mxu0 0.0
        %961 = vmatpush1.msra.mxu0 %v911
        %962 = vmatprep.subr.mxu0 0.0
        %963 = vmatpush1.msra.mxu0 %v912
        %964 = vmatprep.subr.mxu0 0.0
        %965 = vmatpush1.msra.mxu0 %v913
        %966 = vmatprep.subr.mxu0 0.0
        %967 = vmatpush1.msra.mxu0 %v914
        %968 = vmatprep.subr.mxu0 0.0
        %969 = vmatpush1.msra.mxu0 %v915
        %970 = vmatprep.subr.mxu0 0.0
        %971 = vmatpush1.msra.mxu0 %v916
        %972 = vmatprep.subr.mxu0 0.0
        %973 = vmatpush1.msra.mxu0 %v917
        %974 = vmatprep.subr.mxu0 0.0
        %975 = vmatpush1.msra.mxu0 %v918
        %976 = vmatprep.subr.mxu0 0.0
        %977 = vmatpush1.msra.mxu0 %v919
        %978 = vmatprep.subr.mxu0 0.0
        %979 = vmatpush1.msra.mxu0 %v920
        %980 = vmatprep.subr.mxu0 0.0
        %981 = vmatpush1.msra.mxu0 %v921
        %982 = vmatprep.subr.mxu0 0.0
        %983 = vmatpush1.msra.mxu0 %v922
        %984 = vmatprep.subr.mxu0 0.0
        %985 = vmatpush1.msra.mxu0 %v923
        %986 = vmatprep.subr.mxu0 0.0
        %987 = vmatpush1.msra.mxu0 %v924
        %988 = vmatprep.subr.mxu0 0.0
        %989 = vmatpush1.msra.mxu0 %v925
        %990 = vmatprep.subr.mxu0 0.0
        %991 = vmatpush1.msra.mxu0 %v926
        %992 = vmatprep.subr.mxu0 0.0
        %993 = vmatpush1.msra.mxu0 %v927
        %994 = vmatprep.subr.mxu0 0.0
        %995 = vmatpush1.msra.mxu0 %v928
        %996 = vmatprep.subr.mxu0 0.0
        %997 = vmatpush1.msra.mxu0 %v929
        %998 = vmatprep.mubr.f32.mxu0 %v897
        %999 = vmatmul.mubr.f32.gmra.mrb[0].mxu0 %v896
        %v1000 = vpop.f32.mrb[0].mxu0
        %v1001 = vadd.f32 %v933, %v1000
        %v1002 = vpop.f32.mrb[0].mxu0
        %1003 = vdwg.mxu0
        %vm1004 = vcmask 64512
        %1005 = vst.msk [vmem:[%s242] sm:$0xff] %vm1004, %v1001
        %s1006 = sand.u32 %s159, 1
        %s1007 = scalar_lea.sflag [#allocation3], %s1006
        %s1008 = sand.u32 %s159, 1
        %s1009 = smul.addr %s1008, 8
        %s1010 = scalar_lea.vmem [#allocation2], %s1009
        // Predicated region
        $region45: #{tpu_custom_call.1} parent=43 // pred_check
          %p1011 = pneg %p169
        $region46: #{tpu_custom_call.1} parent=43 // pred_check_branch
          %1013 = sbr.rel (%p1011) target = $region48
        $region47: #{tpu_custom_call.1} parent=43 // pred_region
          %s1015 = ssub.s32 128, 128
          %1016 = vsyncadd %s1007, %s1015
          %s1017 = smul.addr %s20, 128
          %s1018 = scalar_lea.hbm %s6, %s1017
          %s1020 = sshll.u32 %s1010, 4
          %s1021 = int_to_ptr.vmem [resolvable:$true] %s1020
          %1023 = dma.vmem_to_hbm [thread:$0]  %s1021, 128, %s1018, %s1007
        $region48: #{tpu_custom_call.1} parent=43 // pred_fallthru
          _
      $region44: #{tpu_custom_call.1} parent=5 // pred_fallthru
        _
      %p1024 = scmp.le.s32.totalorder 2, %s15
      // Predicated region
      $region49: #{tpu_custom_call.1} parent=5 // pred_check
        %p1025 = pneg %p1024
      $region50: #{tpu_custom_call.1} parent=5 // pred_check_branch
        %1027 = sbr.rel (%p1025) target = $region52
      $region51: #{tpu_custom_call.1} parent=5 // pred_region
        %s1028 = ssub.s32 %s15, 2
        // Predicated region
        $region53: #{tpu_custom_call.1} parent=51 // pred_check
          %p1029 = pneg %p175
        $region54: #{tpu_custom_call.1} parent=51 // pred_check_branch
          %1031 = sbr.rel (%p1029) target = $region56
        $region55: #{tpu_custom_call.1} parent=51 // pred_region
          %s1032 = sand.u32 %s160, 1
          %s1033 = scalar_lea.sflag [#allocation3], %s1032
          %s1034 = sand.u32 %s160, 1
          %s1035 = smul.addr %s1034, 8
          %s1036 = scalar_lea.vmem [#allocation2], %s1035
          %1037 = dma.done %s1033, 128
        $region56: #{tpu_custom_call.1} parent=51 // pred_fallthru
          _
      $region52: #{tpu_custom_call.1} parent=5 // pred_fallthru
        _
    $region6: #{tpu_custom_call.1} parent=1 // loop_footer
      %s19 = sadd.s32 1, %s15
    $region7: #{tpu_custom_call.1} parent=1 // loop_footer_branch
      %14 = sbr.rel target = $region3
    $region8: #{tpu_custom_call.1} parent=1 // loop_exit
      _
    %1038 = vsyncpa [#allocation3], 1
    %s1039 = scalar_lea.sflag [#allocation3], 1
    %1040 = vsyncpa %s1039, 1

</llo_original>
